<compile_context>
chip_gen: v5e
topology: v5e:2x2
jax: 0.10.0
libtpu: 0.0.40
codegen_flags: <defaults>
</compile_context>

<pallas_src>
import functools
from math import gcd

import jax
import jax.numpy as jnp
from jax.experimental import pallas as pl
from jax.experimental.pallas import tpu as pltpu


def _res1d_kernel(x_ref, w1_ref, w2_ref, p_ref, vr_ref, gnp_ref, o_ref,
                  col1_ref, col2_ref, *,
                  C_out, K, inv_norm, has_downsample, apply_act, compute_dtype):
    eps = 1e-5
    pad = (K - 1) // 2
    xin = x_ref[...]                      # (C_in, B*Lp) compute dtype
    BLp = xin.shape[-1]
    vr = vr_ref[...]                      # (B, B*Lp) f32: 1 on each sample's valid lanes
    pmix = p_ref[...]                     # (C_out, C_out) f32 block-diag group mixer

    def fill_taps(col_ref, y):
        # Scratch-fill im2col: row block k holds y shifted by (k - pad) lanes.
        # Valid output columns never read across a sample slot because each
        # slot carries its own zero padding; the |d| wrap columns at the slab
        # ends are explicitly zeroed so no uninitialized VMEM feeds the MXU.
        C = y.shape[0]
        for k in range(K):
            d = k - pad
            rows = slice(k * C, (k + 1) * C)
            if d == 0:
                col_ref[rows, :] = y
            elif d > 0:
                col_ref[rows, 0:BLp - d] = y[:, d:BLp]
                col_ref[rows, BLp - d:BLp] = jnp.zeros((C, d), y.dtype)
            else:
                col_ref[rows, -d:BLp] = y[:, 0:BLp + d]
                col_ref[rows, 0:-d] = jnp.zeros((C, -d), y.dtype)

    def group_norm(y, idx):
        # y: (C_out, B*Lp) f32.  Per-sample/per-group stats via MXU reductions
        # (keeps the XLU free); affine application stays on the VPU in f32.
        gamma = gnp_ref[2 * idx]          # (C_out, 1) f32
        beta = gnp_ref[2 * idx + 1]
        tdims = (((1,), (1,)), ((), ()))  # contract lanes of y with lanes of vr
        s = jax.lax.dot_general(y, vr, tdims, preferred_element_type=jnp.float32)
        q = jax.lax.dot_general(y * y, vr, tdims, preferred_element_type=jnp.float32)
        mean = jnp.dot(pmix, s, preferred_element_type=jnp.float32) * inv_norm
        msq = jnp.dot(pmix, q, preferred_element_type=jnp.float32) * inv_norm
        # E[x^2]-E[x]^2 can dip slightly negative in f32 -> clamp before rsqrt.
        # TODO(synk): switch to a two-pass / Welford form once L gets tiled.
        var = jnp.maximum(msq - mean * mean, 0.0)
        scale = gamma * jax.lax.rsqrt(var + eps)          # (C_out, B)
        shift = beta - mean * scale                       # (C_out, B)
        aff = jnp.concatenate([scale, shift], axis=0)     # (2*C_out, B) tiny
        aff_full = jnp.dot(aff, vr, preferred_element_type=jnp.float32)
        # Pad columns get scale = shift = 0 -> output is exactly 0 there, which
        # is precisely the zero padding the next conv expects.
        return y * aff_full[:C_out] + aff_full[C_out:]

    # conv1 (+ 1x1 downsample folded into the centre tap): ONE 2-D MXU matmul
    # with the whole sample batch packed into the matmul N dimension.
    fill_taps(col1_ref, xin)
    both = jnp.dot(w1_ref[...], col1_ref[...], preferred_element_type=jnp.float32)

    # Residual branch first: frees the downsample half of `both` before conv2.
    if has_downsample:
        res = group_norm(both[C_out:, :], 2)
    else:
        # TODO(synk): identity skip is read back from the compute-dtype input.
        res = xin.astype(jnp.float32)

    out1 = jnp.maximum(group_norm(both[:C_out, :], 0), 0.0)   # GN1 + ReLU

    # conv2: second 2-D MXU matmul.
    fill_taps(col2_ref, out1.astype(compute_dtype))
    out2 = jnp.dot(w2_ref[...], col2_ref[...], preferred_element_type=jnp.float32)

    out = group_norm(out2, 1) + res
    if apply_act:
        out = jnp.maximum(out, 0.0)
    o_ref[...] = out.astype(o_ref.dtype)


def res1d_pallas(x_ncl, w1, g1, b1, w2, g2, b2, wd, gd, bd, n_groups, *,
                 act=True, compute_dtype=jnp.bfloat16, out_dtype=jnp.float32,
                 samples_per_step=8):
    """x_ncl: (N, C_in, L); conv weights in PyTorch (O, I, K) layout; wd=None => identity skip."""
    N, C_in, L = x_ncl.shape
    C_out, _, K = w1.shape
    assert K % 2 == 1, "only odd kernel_size ('same'-style padding) supported"
    pad = (K - 1) // 2
    G = n_groups
    assert C_out % G == 0, "GroupNorm requires C_out % groups == 0"
    cg = C_out // G
    has_downsample = wd is not None
    if not has_downsample:
        assert C_in == C_out, "identity skip needs matching channel counts"

    # Samples per grid step: amortize per-step overhead but keep >= 2 grid
    # points so both v7x TensorCores get work (axis is marked "parallel").
    target = max(1, min(samples_per_step, N // 2)) if N > 1 else 1
    B = 1
    for d in range(target, 0, -1):
        if N % d == 0:
            B = d
            break

    # Per-sample slot length: >= L + 2*pad (conv 'same' padding lives inside the
    # slot) and such that B*Lp is a multiple of 128 -> lane-dense blocks/stores.
    q = 128 // gcd(B, 128)
    Lp = -(-(L + 2 * pad) // q) * q
    BLp = B * Lp

    # ---- weights: im2col-flattened 2-D layout, W[o, k*C + c] = w[o, c, k] ----
    w1_cat = jnp.transpose(w1, (0, 2, 1)).reshape(C_out, K * C_in)
    w2_cat = jnp.transpose(w2, (0, 2, 1)).reshape(C_out, K * C_out)
    if has_downsample:
        wd_cat = jnp.zeros((C_out, K * C_in), w1.dtype)
        wd_cat = wd_cat.at[:, pad * C_in:(pad + 1) * C_in].set(wd[:, :, 0])
        w1d = jnp.concatenate([w1_cat, wd_cat], axis=0)           # (2*C_out, K*C_in)
    else:
        w1d = w1_cat
    C1 = w1d.shape[0]

    # ---- input slab (C_in, N*Lp): sample b in lanes [b*Lp, (b+1)*Lp) with its
    #      conv zero padding in place (pad+transpose+cast fuse into one XLA op).
    xp = jnp.pad(x_ncl, ((0, 0), (0, 0), (pad, Lp - L - pad)))
    x2d = jnp.transpose(xp, (1, 0, 2)).reshape(C_in, N * Lp).astype(compute_dtype)

    # ---- per-sample valid-column selector (B, B*Lp), identical every step ----
    pos = jnp.arange(BLp)
    valid = (pos % Lp >= pad) & (pos % Lp < pad + L)
    vr = ((pos // Lp == jnp.arange(B)[:, None]) & valid).astype(jnp.float32)

    # ---- block-diagonal group mixer + stacked GN affine params --------------
    gid = jnp.arange(C_out) // cg
    P = (gid[:, None] == gid[None, :]).astype(jnp.float32)        # (C_out, C_out)
    ones = jnp.ones((C_out,), jnp.float32)
    zeros = jnp.zeros((C_out,), jnp.float32)
    gnp = jnp.stack([g1, b1, g2, b2,
                     gd if has_downsample else ones,
                     bd if has_downsample else zeros], axis=0)
    gnp = gnp.astype(jnp.float32).reshape(6, C_out, 1)

    kern = functools.partial(
        _res1d_kernel, C_out=C_out, K=K, inv_norm=1.0 / float(cg * L),
        has_downsample=has_downsample, apply_act=act, compute_dtype=compute_dtype)

    def full(shape):
        return pl.BlockSpec(shape, lambda n: (0,) * len(shape))

    # Rough per-step VMEM budget (double-buffered I/O + weights + tap scratch +
    # f32 temporaries); set explicitly so the same tiling also fits v7x (64 MiB).
    isz = jnp.dtype(compute_dtype).itemsize
    osz = jnp.dtype(out_dtype).itemsize
    est = (2 * C_in * BLp * isz + 2 * C_out * BLp * osz
           + (C1 * K * C_in + C_out * K * C_out) * isz
           + (B * BLp + C_out * C_out + 6 * C_out) * 4
           + (K * C_in + K * C_out) * BLp * isz
           + 8 * C_out * BLp * 4)
    vmem_limit = int(min(max(2 * est, 32 * 2 ** 20), 64 * 2 ** 20))

    conv_flops = 2 * N * Lp * K * (C1 * C_in + C_out * C_out)
    gn_flops = 3 * 2 * N * Lp * C_out * (2 + B)     # coarse: stats + affine expand
    cost = pl.CostEstimate(
        flops=int(conv_flops + gn_flops),
        transcendentals=int(3 * C_out * N),
        bytes_accessed=int(x2d.size * isz + C_out * N * Lp * osz
                           + (w1d.size + w2_cat.size) * isz
                           + (vr.size + P.size + gnp.size) * 4))

    out2d = pl.pallas_call(
        kern,
        out_shape=jax.ShapeDtypeStruct((C_out, N * Lp), out_dtype),
        grid=(N // B,),
        in_specs=[
            pl.BlockSpec((C_in, BLp), lambda n: (0, n)),
            full((C1, K * C_in)),
            full((C_out, K * C_out)),
            full((C_out, C_out)),
            full((B, BLp)),
            full((6, C_out, 1)),
        ],
        out_specs=pl.BlockSpec((C_out, BLp), lambda n: (0, n)),
        scratch_shapes=[pltpu.VMEM((K * C_in, BLp), compute_dtype),
                        pltpu.VMEM((K * C_out, BLp), compute_dtype)],
        compiler_params=pltpu.CompilerParams(
            dimension_semantics=("parallel",),
            vmem_limit_bytes=vmem_limit),
        cost_estimate=cost,
    )(x2d, w1d.astype(compute_dtype), w2_cat.astype(compute_dtype), P, vr, gnp)

    # Drop each sample's slot padding; return PyTorch (N, C_out, L) layout.
    out = out2d.reshape(C_out, N, Lp)[:, :, pad:pad + L]
    return jnp.transpose(out, (1, 0, 2))


# ------------------------- pure-JAX reference (PyTorch semantics) ------------
def _ref_conv1d(x_ncl, w, pad):
    return jax.lax.conv_general_dilated(
        x_ncl, w, window_strides=(1,), padding=[(pad, pad)],
        dimension_numbers=('NCH', 'OIH', 'NCH'))


def _ref_gn(x_ncl, gamma, beta, G, eps=1e-5):
    N, C, L = x_ncl.shape
    xr = x_ncl.reshape(N, G, -1)
    mean = xr.mean(axis=2, keepdims=True)
    var = ((xr - mean) ** 2).mean(axis=2, keepdims=True)
    xn = ((xr - mean) / jnp.sqrt(var + eps)).reshape(N, C, L)
    return xn * gamma[None, :, None] + beta[None, :, None]


def res1d_reference(x, w1, g1, b1, w2, g2, b2, wd, gd, bd, G, K, act=True):
    pad = (K - 1) // 2
    out = _ref_conv1d(x, w1, pad)
    out = jnp.maximum(_ref_gn(out, g1, b1, G), 0.0)
    out = _ref_conv1d(out, w2, pad)
    out = _ref_gn(out, g2, b2, G)
    if wd is not None:
        res = _ref_gn(_ref_conv1d(x, wd, 0), gd, bd, G)
    else:
        res = x
    out = out + res
    return jnp.maximum(out, 0.0) if act else out


# ------------------------------------------------------------------------------
if __name__ == "__main__":
    # --- case 1: downsample branch (n_in != n_out), 4 groups of 2 channels ---
    N, n_in, n_out, L, K, ng = 4, 4, 8, 16, 3, 4
    G = gcd(ng, n_out)

    key = jax.random.PRNGKey(0)
    ks = jax.random.split(key, 12)
    x = jax.random.normal(ks[0], (N, n_in, L), jnp.float32)
    w1 = jax.random.normal(ks[1], (n_out, n_in, K), jnp.float32) * 0.3
    w2 = jax.random.normal(ks[2], (n_out, n_out, K), jnp.float32) * 0.3
    wd = jax.random.normal(ks[3], (n_out, n_in, 1), jnp.float32) * 0.3
    g1 = 1.0 + 0.1 * jax.random.normal(ks[4], (n_out,), jnp.float32)
    b1 = 0.1 * jax.random.normal(ks[5], (n_out,), jnp.float32)
    g2 = 1.0 + 0.1 * jax.random.normal(ks[6], (n_out,), jnp.float32)
    b2 = 0.1 * jax.random.normal(ks[7], (n_out,), jnp.float32)
    gd = 1.0 + 0.1 * jax.random.normal(ks[8], (n_out,), jnp.float32)
    bd = 0.1 * jax.random.normal(ks[9], (n_out,), jnp.float32)

    ref = res1d_reference(x, w1, g1, b1, w2, g2, b2, wd, gd, bd, G, K)

    # f32 compute path: tight check against the f32 reference.
    out_f32 = jax.block_until_ready(
        res1d_pallas(x, w1, g1, b1, w2, g2, b2, wd, gd, bd, G,
                     compute_dtype=jnp.float32))
    assert out_f32.shape == (N, n_out, L)
    err = float(jnp.max(jnp.abs(out_f32 - ref)))
    assert jnp.allclose(out_f32, ref, rtol=1e-4, atol=1e-4), f"f32 max abs err {err}"

    # bf16 matmul path (production mode): looser tolerance for bf16 MXU inputs.
    out_bf16 = jax.block_until_ready(
        res1d_pallas(x, w1, g1, b1, w2, g2, b2, wd, gd, bd, G,
                     compute_dtype=jnp.bfloat16))
    errb = float(jnp.max(jnp.abs(out_bf16 - ref)))
    assert jnp.allclose(out_bf16, ref, rtol=1e-1, atol=1e-1), f"bf16 max abs err {errb}"

    # --- case 2: identity skip (n_in == n_out, no downsample) ---
    Ni, C, Li = 2, 8, 16
    Gi = gcd(ng, C)
    xi = jax.random.normal(ks[10], (Ni, C, Li), jnp.float32)
    w1i = jax.random.normal(ks[11], (C, C, K), jnp.float32) * 0.3
    refi = res1d_reference(xi, w1i, g1, b1, w2, g2, b2, None, None, None, Gi, K)
    outi = jax.block_until_ready(
        res1d_pallas(xi, w1i, g1, b1, w2, g2, b2, None, None, None, Gi,
                     compute_dtype=jnp.float32))
    erri = float(jnp.max(jnp.abs(outi - refi)))
    assert jnp.allclose(outi, refi, rtol=1e-4, atol=1e-4), f"identity max abs err {erri}"

    print("KERNEL_OK")
</pallas_src>

<mosaic_0001>
module attributes {stable_mosaic.version = 11 : i64} {
  func.func @_res1d_kernel(%arg0: i32, %arg1: memref<4x128xf32, #tpu.memory_space<vmem>>, %arg2: memref<16x12xf32, #tpu.memory_space<vmem>>, %arg3: memref<8x24xf32, #tpu.memory_space<vmem>>, %arg4: memref<8x8xf32, #tpu.memory_space<vmem>>, %arg5: memref<2x128xf32, #tpu.memory_space<vmem>>, %arg6: memref<6x8x1xf32, #tpu.memory_space<vmem>>, %arg7: memref<8x128xf32, #tpu.memory_space<vmem>>, %arg8: memref<12x128xf32, #tpu.memory_space<vmem>>, %arg9: memref<24x128xf32, #tpu.memory_space<vmem>>) attributes {dimension_semantics = [#tpu.dimension_semantics<parallel>], iteration_bounds = array<i64: 2>, scalar_prefetch = 0 : i64, scratch_operands = 2 : i64, tpu.core_type = #tpu.core_type<tc>, window_params = [{transform_indices = @transform_0, window_bounds = array<i64: 4, 128>}, {pipeline_mode = #tpu.pipeline_mode<synchronous>, transform_indices = @transform_1, window_bounds = array<i64: 16, 12>}, {pipeline_mode = #tpu.pipeline_mode<synchronous>, transform_indices = @transform_2, window_bounds = array<i64: 8, 24>}, {pipeline_mode = #tpu.pipeline_mode<synchronous>, transform_indices = @transform_3, window_bounds = array<i64: 8, 8>}, {pipeline_mode = #tpu.pipeline_mode<synchronous>, transform_indices = @transform_4, window_bounds = array<i64: 2, 128>}, {pipeline_mode = #tpu.pipeline_mode<synchronous>, transform_indices = @transform_5, window_bounds = array<i64: 6, 8, 1>}, {transform_indices = @transform_6, window_bounds = array<i64: 8, 128>}]} {
    %c0 = arith.constant 0 : index
    %c0_0 = arith.constant 0 : index
    %0 = vector.load %arg1[%c0, %c0_0] : memref<4x128xf32, #tpu.memory_space<vmem>>, vector<4x128xf32>
    %c0_1 = arith.constant 0 : index
    %c0_2 = arith.constant 0 : index
    %1 = vector.load %arg5[%c0_1, %c0_2] : memref<2x128xf32, #tpu.memory_space<vmem>>, vector<2x128xf32>
    %c0_3 = arith.constant 0 : index
    %c0_4 = arith.constant 0 : index
    %2 = vector.load %arg4[%c0_3, %c0_4] : memref<8x8xf32, #tpu.memory_space<vmem>>, vector<8x8xf32>
    %3 = vector.extract_strided_slice %0 {offsets = [0, 0], sizes = [4, 127], strides = [1, 1]} : vector<4x128xf32> to vector<4x127xf32>
    %c0_5 = arith.constant 0 : index
    %c1 = arith.constant 1 : index
    %4 = vector.load %arg8[%c0_5, %c1] : memref<12x128xf32, #tpu.memory_space<vmem>>, vector<4x127xf32>
    tpu.vector_store %arg8[%c0_5, %c1], %3 {strides = array<i32>} : memref<12x128xf32, #tpu.memory_space<vmem>>, vector<4x127xf32>,
    %cst = arith.constant 0.000000e+00 : f32
    %5 = vector.broadcast %cst : f32 to vector<4x1xf32>
    %c0_6 = arith.constant 0 : index
    %c0_7 = arith.constant 0 : index
    %6 = vector.load %arg8[%c0_6, %c0_7] : memref<12x128xf32, #tpu.memory_space<vmem>>, vector<4x1xf32>
    tpu.vector_store %arg8[%c0_6, %c0_7], %5 {strides = array<i32>} : memref<12x128xf32, #tpu.memory_space<vmem>>, vector<4x1xf32>,
    %c4 = arith.constant 4 : index
    %c0_8 = arith.constant 0 : index
    %7 = vector.load %arg8[%c4, %c0_8] : memref<12x128xf32, #tpu.memory_space<vmem>>, vector<4x128xf32>
    tpu.vector_store %arg8[%c4, %c0_8], %0 {strides = array<i32>} : memref<12x128xf32, #tpu.memory_space<vmem>>, vector<4x128xf32>,
    %8 = vector.extract_strided_slice %0 {offsets = [0, 1], sizes = [4, 127], strides = [1, 1]} : vector<4x128xf32> to vector<4x127xf32>
    %c8 = arith.constant 8 : index
    %c0_9 = arith.constant 0 : index
    %9 = vector.load %arg8[%c8, %c0_9] : memref<12x128xf32, #tpu.memory_space<vmem>>, vector<4x127xf32>
    tpu.vector_store %arg8[%c8, %c0_9], %8 {strides = array<i32>} : memref<12x128xf32, #tpu.memory_space<vmem>>, vector<4x127xf32>,
    %cst_10 = arith.constant 0.000000e+00 : f32
    %10 = vector.broadcast %cst_10 : f32 to vector<4x1xf32>
    %c8_11 = arith.constant 8 : index
    %c127 = arith.constant 127 : index
    %11 = vector.load %arg8[%c8_11, %c127] : memref<12x128xf32, #tpu.memory_space<vmem>>, vector<4x1xf32>
    tpu.vector_store %arg8[%c8_11, %c127], %10 {strides = array<i32>} : memref<12x128xf32, #tpu.memory_space<vmem>>, vector<4x1xf32>,
    %c0_12 = arith.constant 0 : index
    %c0_13 = arith.constant 0 : index
    %12 = vector.load %arg2[%c0_12, %c0_13] : memref<16x12xf32, #tpu.memory_space<vmem>>, vector<16x12xf32>
    %c0_14 = arith.constant 0 : index
    %c0_15 = arith.constant 0 : index
    %13 = vector.load %arg8[%c0_14, %c0_15] : memref<12x128xf32, #tpu.memory_space<vmem>>, vector<12x128xf32>
    %cst_16 = arith.constant dense<0.000000e+00> : vector<16x128xf32>
    %14 = tpu.matmul %12, %13, %cst_16 {dimension_numbers = #tpu.dot_dimension_numbers<[1], [0], [0], [1], [0, 0, 1, 1], [], []>} : vector<16x12xf32>, vector<12x128xf32>, vector<16x128xf32> -> vector<16x128xf32>
    %15 = vector.extract_strided_slice %14 {offsets = [8, 0], sizes = [8, 128], strides = [1, 1]} : vector<16x128xf32> to vector<8x128xf32>
    %c4_17 = arith.constant 4 : index
    %c0_18 = arith.constant 0 : index
    %c0_19 = arith.constant 0 : index
    %16 = vector.load %arg6[%c4_17, %c0_18, %c0_19] : memref<6x8x1xf32, #tpu.memory_space<vmem>>, vector<1x8x1xf32>
    %17 = vector.shape_cast %16 : vector<1x8x1xf32> to vector<8x1xf32>
    %c5 = arith.constant 5 : index
    %c0_20 = arith.constant 0 : index
    %c0_21 = arith.constant 0 : index
    %18 = vector.load %arg6[%c5, %c0_20, %c0_21] : memref<6x8x1xf32, #tpu.memory_space<vmem>>, vector<1x8x1xf32>
    %19 = vector.shape_cast %18 : vector<1x8x1xf32> to vector<8x1xf32>
    %cst_22 = arith.constant dense<0.000000e+00> : vector<8x2xf32>
    %20 = tpu.matmul %15, %1, %cst_22 {dimension_numbers = #tpu.dot_dimension_numbers<[1], [1], [0], [0], [0, 0, 1, 0], [], []>} : vector<8x128xf32>, vector<2x128xf32>, vector<8x2xf32> -> vector<8x2xf32>
    %21 = arith.mulf %15, %15 : vector<8x128xf32>
    %cst_23 = arith.constant dense<0.000000e+00> : vector<8x2xf32>
    %22 = tpu.matmul %21, %1, %cst_23 {dimension_numbers = #tpu.dot_dimension_numbers<[1], [1], [0], [0], [0, 0, 1, 0], [], []>} : vector<8x128xf32>, vector<2x128xf32>, vector<8x2xf32> -> vector<8x2xf32>
    %cst_24 = arith.constant dense<0.000000e+00> : vector<8x2xf32>
    %23 = tpu.matmul %2, %20, %cst_24 {dimension_numbers = #tpu.dot_dimension_numbers<[1], [0], [0], [1], [0, 0, 1, 1], [], []>} : vector<8x8xf32>, vector<8x2xf32>, vector<8x2xf32> -> vector<8x2xf32>
    %cst_25 = arith.constant 3.125000e-02 : f32
    %24 = vector.broadcast %cst_25 : f32 to vector<8x2xf32>
    %25 = arith.mulf %23, %24 : vector<8x2xf32>
    %cst_26 = arith.constant dense<0.000000e+00> : vector<8x2xf32>
    %26 = tpu.matmul %2, %22, %cst_26 {dimension_numbers = #tpu.dot_dimension_numbers<[1], [0], [0], [1], [0, 0, 1, 1], [], []>} : vector<8x8xf32>, vector<8x2xf32>, vector<8x2xf32> -> vector<8x2xf32>
    %cst_27 = arith.constant 3.125000e-02 : f32
    %27 = vector.broadcast %cst_27 : f32 to vector<8x2xf32>
    %28 = arith.mulf %26, %27 : vector<8x2xf32>
    %29 = arith.mulf %25, %25 : vector<8x2xf32>
    %30 = arith.subf %28, %29 : vector<8x2xf32>
    %cst_28 = arith.constant 0.000000e+00 : f32
    %31 = vector.broadcast %cst_28 : f32 to vector<8x2xf32>
    %32 = arith.maximumf %30, %31 : vector<8x2xf32>
    %cst_29 = arith.constant 9.99999974E-6 : f32
    %33 = vector.broadcast %cst_29 : f32 to vector<8x2xf32>
    %34 = arith.addf %32, %33 : vector<8x2xf32>
    %35 = math.rsqrt %34 : vector<8x2xf32>
    %36 = vector.broadcast %17 : vector<8x1xf32> to vector<8x2xf32>
    %37 = arith.mulf %36, %35 : vector<8x2xf32>
    %38 = arith.mulf %25, %37 : vector<8x2xf32>
    %39 = vector.broadcast %19 : vector<8x1xf32> to vector<8x2xf32>
    %40 = arith.subf %39, %38 : vector<8x2xf32>
    %41 = tpu.concatenate %37, %40 in 0 : vector<8x2xf32>, vector<8x2xf32> -> vector<16x2xf32>
    %cst_30 = arith.constant dense<0.000000e+00> : vector<16x128xf32>
    %42 = tpu.matmul %41, %1, %cst_30 {dimension_numbers = #tpu.dot_dimension_numbers<[1], [0], [0], [1], [0, 0, 1, 1], [], []>} : vector<16x2xf32>, vector<2x128xf32>, vector<16x128xf32> -> vector<16x128xf32>
    %43 = vector.extract_strided_slice %42 {offsets = [0, 0], sizes = [8, 128], strides = [1, 1]} : vector<16x128xf32> to vector<8x128xf32>
    %44 = arith.mulf %15, %43 : vector<8x128xf32>
    %45 = vector.extract_strided_slice %42 {offsets = [8, 0], sizes = [8, 128], strides = [1, 1]} : vector<16x128xf32> to vector<8x128xf32>
    %46 = arith.addf %44, %45 : vector<8x128xf32>
    %47 = vector.extract_strided_slice %14 {offsets = [0, 0], sizes = [8, 128], strides = [1, 1]} : vector<16x128xf32> to vector<8x128xf32>
    %c0_31 = arith.constant 0 : index
    %c0_32 = arith.constant 0 : index
    %c0_33 = arith.constant 0 : index
    %48 = vector.load %arg6[%c0_31, %c0_32, %c0_33] : memref<6x8x1xf32, #tpu.memory_space<vmem>>, vector<1x8x1xf32>
    %49 = vector.shape_cast %48 : vector<1x8x1xf32> to vector<8x1xf32>
    %c1_34 = arith.constant 1 : index
    %c0_35 = arith.constant 0 : index
    %c0_36 = arith.constant 0 : index
    %50 = vector.load %arg6[%c1_34, %c0_35, %c0_36] : memref<6x8x1xf32, #tpu.memory_space<vmem>>, vector<1x8x1xf32>
    %51 = vector.shape_cast %50 : vector<1x8x1xf32> to vector<8x1xf32>
    %cst_37 = arith.constant dense<0.000000e+00> : vector<8x2xf32>
    %52 = tpu.matmul %47, %1, %cst_37 {dimension_numbers = #tpu.dot_dimension_numbers<[1], [1], [0], [0], [0, 0, 1, 0], [], []>} : vector<8x128xf32>, vector<2x128xf32>, vector<8x2xf32> -> vector<8x2xf32>
    %53 = arith.mulf %47, %47 : vector<8x128xf32>
    %cst_38 = arith.constant dense<0.000000e+00> : vector<8x2xf32>
    %54 = tpu.matmul %53, %1, %cst_38 {dimension_numbers = #tpu.dot_dimension_numbers<[1], [1], [0], [0], [0, 0, 1, 0], [], []>} : vector<8x128xf32>, vector<2x128xf32>, vector<8x2xf32> -> vector<8x2xf32>
    %cst_39 = arith.constant dense<0.000000e+00> : vector<8x2xf32>
    %55 = tpu.matmul %2, %52, %cst_39 {dimension_numbers = #tpu.dot_dimension_numbers<[1], [0], [0], [1], [0, 0, 1, 1], [], []>} : vector<8x8xf32>, vector<8x2xf32>, vector<8x2xf32> -> vector<8x2xf32>
    %cst_40 = arith.constant 3.125000e-02 : f32
    %56 = vector.broadcast %cst_40 : f32 to vector<8x2xf32>
    %57 = arith.mulf %55, %56 : vector<8x2xf32>
    %cst_41 = arith.constant dense<0.000000e+00> : vector<8x2xf32>
    %58 = tpu.matmul %2, %54, %cst_41 {dimension_numbers = #tpu.dot_dimension_numbers<[1], [0], [0], [1], [0, 0, 1, 1], [], []>} : vector<8x8xf32>, vector<8x2xf32>, vector<8x2xf32> -> vector<8x2xf32>
    %cst_42 = arith.constant 3.125000e-02 : f32
    %59 = vector.broadcast %cst_42 : f32 to vector<8x2xf32>
    %60 = arith.mulf %58, %59 : vector<8x2xf32>
    %61 = arith.mulf %57, %57 : vector<8x2xf32>
    %62 = arith.subf %60, %61 : vector<8x2xf32>
    %cst_43 = arith.constant 0.000000e+00 : f32
    %63 = vector.broadcast %cst_43 : f32 to vector<8x2xf32>
    %64 = arith.maximumf %62, %63 : vector<8x2xf32>
    %cst_44 = arith.constant 9.99999974E-6 : f32
    %65 = vector.broadcast %cst_44 : f32 to vector<8x2xf32>
    %66 = arith.addf %64, %65 : vector<8x2xf32>
    %67 = math.rsqrt %66 : vector<8x2xf32>
    %68 = vector.broadcast %49 : vector<8x1xf32> to vector<8x2xf32>
    %69 = arith.mulf %68, %67 : vector<8x2xf32>
    %70 = arith.mulf %57, %69 : vector<8x2xf32>
    %71 = vector.broadcast %51 : vector<8x1xf32> to vector<8x2xf32>
    %72 = arith.subf %71, %70 : vector<8x2xf32>
    %73 = tpu.concatenate %69, %72 in 0 : vector<8x2xf32>, vector<8x2xf32> -> vector<16x2xf32>
    %cst_45 = arith.constant dense<0.000000e+00> : vector<16x128xf32>
    %74 = tpu.matmul %73, %1, %cst_45 {dimension_numbers = #tpu.dot_dimension_numbers<[1], [0], [0], [1], [0, 0, 1, 1], [], []>} : vector<16x2xf32>, vector<2x128xf32>, vector<16x128xf32> -> vector<16x128xf32>
    %75 = vector.extract_strided_slice %74 {offsets = [0, 0], sizes = [8, 128], strides = [1, 1]} : vector<16x128xf32> to vector<8x128xf32>
    %76 = arith.mulf %47, %75 : vector<8x128xf32>
    %77 = vector.extract_strided_slice %74 {offsets = [8, 0], sizes = [8, 128], strides = [1, 1]} : vector<16x128xf32> to vector<8x128xf32>
    %78 = arith.addf %76, %77 : vector<8x128xf32>
    %cst_46 = arith.constant 0.000000e+00 : f32
    %79 = vector.broadcast %cst_46 : f32 to vector<8x128xf32>
    %80 = arith.maximumf %78, %79 : vector<8x128xf32>
    %81 = vector.extract_strided_slice %80 {offsets = [0, 0], sizes = [8, 127], strides = [1, 1]} : vector<8x128xf32> to vector<8x127xf32>
    %c0_47 = arith.constant 0 : index
    %c1_48 = arith.constant 1 : index
    %82 = vector.load %arg9[%c0_47, %c1_48] : memref<24x128xf32, #tpu.memory_space<vmem>>, vector<8x127xf32>
    tpu.vector_store %arg9[%c0_47, %c1_48], %81 {strides = array<i32>} : memref<24x128xf32, #tpu.memory_space<vmem>>, vector<8x127xf32>,
    %cst_49 = arith.constant 0.000000e+00 : f32
    %83 = vector.broadcast %cst_49 : f32 to vector<8x1xf32>
    %c0_50 = arith.constant 0 : index
    %c0_51 = arith.constant 0 : index
    %84 = vector.load %arg9[%c0_50, %c0_51] : memref<24x128xf32, #tpu.memory_space<vmem>>, vector<8x1xf32>
    tpu.vector_store %arg9[%c0_50, %c0_51], %83 {strides = array<i32>} : memref<24x128xf32, #tpu.memory_space<vmem>>, vector<8x1xf32>,
    %c8_52 = arith.constant 8 : index
    %c0_53 = arith.constant 0 : index
    %85 = vector.load %arg9[%c8_52, %c0_53] : memref<24x128xf32, #tpu.memory_space<vmem>>, vector<8x128xf32>
    tpu.vector_store %arg9[%c8_52, %c0_53], %80 {strides = array<i32>} : memref<24x128xf32, #tpu.memory_space<vmem>>, vector<8x128xf32>,
    %86 = vector.extract_strided_slice %80 {offsets = [0, 1], sizes = [8, 127], strides = [1, 1]} : vector<8x128xf32> to vector<8x127xf32>
    %c16 = arith.constant 16 : index
    %c0_54 = arith.constant 0 : index
    %87 = vector.load %arg9[%c16, %c0_54] : memref<24x128xf32, #tpu.memory_space<vmem>>, vector<8x127xf32>
    tpu.vector_store %arg9[%c16, %c0_54], %86 {strides = array<i32>} : memref<24x128xf32, #tpu.memory_space<vmem>>, vector<8x127xf32>,
    %cst_55 = arith.constant 0.000000e+00 : f32
    %88 = vector.broadcast %cst_55 : f32 to vector<8x1xf32>
    %c16_56 = arith.constant 16 : index
    %c127_57 = arith.constant 127 : index
    %89 = vector.load %arg9[%c16_56, %c127_57] : memref<24x128xf32, #tpu.memory_space<vmem>>, vector<8x1xf32>
    tpu.vector_store %arg9[%c16_56, %c127_57], %88 {strides = array<i32>} : memref<24x128xf32, #tpu.memory_space<vmem>>, vector<8x1xf32>,
    %c0_58 = arith.constant 0 : index
    %c0_59 = arith.constant 0 : index
    %90 = vector.load %arg3[%c0_58, %c0_59] : memref<8x24xf32, #tpu.memory_space<vmem>>, vector<8x24xf32>
    %c0_60 = arith.constant 0 : index
    %c0_61 = arith.constant 0 : index
    %91 = vector.load %arg9[%c0_60, %c0_61] : memref<24x128xf32, #tpu.memory_space<vmem>>, vector<24x128xf32>
    %cst_62 = arith.constant dense<0.000000e+00> : vector<8x128xf32>
    %92 = tpu.matmul %90, %91, %cst_62 {dimension_numbers = #tpu.dot_dimension_numbers<[1], [0], [0], [1], [0, 0, 1, 1], [], []>} : vector<8x24xf32>, vector<24x128xf32>, vector<8x128xf32> -> vector<8x128xf32>
    %c2 = arith.constant 2 : index
    %c0_63 = arith.constant 0 : index
    %c0_64 = arith.constant 0 : index
    %93 = vector.load %arg6[%c2, %c0_63, %c0_64] : memref<6x8x1xf32, #tpu.memory_space<vmem>>, vector<1x8x1xf32>
    %94 = vector.shape_cast %93 : vector<1x8x1xf32> to vector<8x1xf32>
    %c3 = arith.constant 3 : index
    %c0_65 = arith.constant 0 : index
    %c0_66 = arith.constant 0 : index
    %95 = vector.load %arg6[%c3, %c0_65, %c0_66] : memref<6x8x1xf32, #tpu.memory_space<vmem>>, vector<1x8x1xf32>
    %96 = vector.shape_cast %95 : vector<1x8x1xf32> to vector<8x1xf32>
    %cst_67 = arith.constant dense<0.000000e+00> : vector<8x2xf32>
    %97 = tpu.matmul %92, %1, %cst_67 {dimension_numbers = #tpu.dot_dimension_numbers<[1], [1], [0], [0], [0, 0, 1, 0], [], []>} : vector<8x128xf32>, vector<2x128xf32>, vector<8x2xf32> -> vector<8x2xf32>
    %98 = arith.mulf %92, %92 : vector<8x128xf32>
    %cst_68 = arith.constant dense<0.000000e+00> : vector<8x2xf32>
    %99 = tpu.matmul %98, %1, %cst_68 {dimension_numbers = #tpu.dot_dimension_numbers<[1], [1], [0], [0], [0, 0, 1, 0], [], []>} : vector<8x128xf32>, vector<2x128xf32>, vector<8x2xf32> -> vector<8x2xf32>
    %cst_69 = arith.constant dense<0.000000e+00> : vector<8x2xf32>
    %100 = tpu.matmul %2, %97, %cst_69 {dimension_numbers = #tpu.dot_dimension_numbers<[1], [0], [0], [1], [0, 0, 1, 1], [], []>} : vector<8x8xf32>, vector<8x2xf32>, vector<8x2xf32> -> vector<8x2xf32>
    %cst_70 = arith.constant 3.125000e-02 : f32
    %101 = vector.broadcast %cst_70 : f32 to vector<8x2xf32>
    %102 = arith.mulf %100, %101 : vector<8x2xf32>
    %cst_71 = arith.constant dense<0.000000e+00> : vector<8x2xf32>
    %103 = tpu.matmul %2, %99, %cst_71 {dimension_numbers = #tpu.dot_dimension_numbers<[1], [0], [0], [1], [0, 0, 1, 1], [], []>} : vector<8x8xf32>, vector<8x2xf32>, vector<8x2xf32> -> vector<8x2xf32>
    %cst_72 = arith.constant 3.125000e-02 : f32
    %104 = vector.broadcast %cst_72 : f32 to vector<8x2xf32>
    %105 = arith.mulf %103, %104 : vector<8x2xf32>
    %106 = arith.mulf %102, %102 : vector<8x2xf32>
    %107 = arith.subf %105, %106 : vector<8x2xf32>
    %cst_73 = arith.constant 0.000000e+00 : f32
    %108 = vector.broadcast %cst_73 : f32 to vector<8x2xf32>
    %109 = arith.maximumf %107, %108 : vector<8x2xf32>
    %cst_74 = arith.constant 9.99999974E-6 : f32
    %110 = vector.broadcast %cst_74 : f32 to vector<8x2xf32>
    %111 = arith.addf %109, %110 : vector<8x2xf32>
    %112 = math.rsqrt %111 : vector<8x2xf32>
    %113 = vector.broadcast %94 : vector<8x1xf32> to vector<8x2xf32>
    %114 = arith.mulf %113, %112 : vector<8x2xf32>
    %115 = arith.mulf %102, %114 : vector<8x2xf32>
    %116 = vector.broadcast %96 : vector<8x1xf32> to vector<8x2xf32>
    %117 = arith.subf %116, %115 : vector<8x2xf32>
    %118 = tpu.concatenate %114, %117 in 0 : vector<8x2xf32>, vector<8x2xf32> -> vector<16x2xf32>
    %cst_75 = arith.constant dense<0.000000e+00> : vector<16x128xf32>
    %119 = tpu.matmul %118, %1, %cst_75 {dimension_numbers = #tpu.dot_dimension_numbers<[1], [0], [0], [1], [0, 0, 1, 1], [], []>} : vector<16x2xf32>, vector<2x128xf32>, vector<16x128xf32> -> vector<16x128xf32>
    %120 = vector.extract_strided_slice %119 {offsets = [0, 0], sizes = [8, 128], strides = [1, 1]} : vector<16x128xf32> to vector<8x128xf32>
    %121 = arith.mulf %92, %120 : vector<8x128xf32>
    %122 = vector.extract_strided_slice %119 {offsets = [8, 0], sizes = [8, 128], strides = [1, 1]} : vector<16x128xf32> to vector<8x128xf32>
    %123 = arith.addf %121, %122 : vector<8x128xf32>
    %124 = arith.addf %123, %46 : vector<8x128xf32>
    %cst_76 = arith.constant 0.000000e+00 : f32
    %125 = vector.broadcast %cst_76 : f32 to vector<8x128xf32>
    %126 = arith.maximumf %124, %125 : vector<8x128xf32>
    %c0_77 = arith.constant 0 : index
    %c0_78 = arith.constant 0 : index
    %127 = vector.load %arg7[%c0_77, %c0_78] : memref<8x128xf32, #tpu.memory_space<vmem>>, vector<8x128xf32>
    tpu.vector_store %arg7[%c0_77, %c0_78], %126 {strides = array<i32>} : memref<8x128xf32, #tpu.memory_space<vmem>>, vector<8x128xf32>,
    return
  }
  func.func @transform_0(%arg0: i32) -> (i32, i32) {
    %c0_i32 = arith.constant 0 : i32
    %c0_i32_0 = arith.constant 0 : i32
    return %c0_i32, %arg0 : i32, i32
  }
  func.func @transform_1(%arg0: i32) -> (i32, i32) {
    %c0_i32 = arith.constant 0 : i32
    %c0_i32_0 = arith.constant 0 : i32
    %c0_i32_1 = arith.constant 0 : i32
    return %c0_i32, %c0_i32_0 : i32, i32
  }
  func.func @transform_2(%arg0: i32) -> (i32, i32) {
    %c0_i32 = arith.constant 0 : i32
    %c0_i32_0 = arith.constant 0 : i32
    %c0_i32_1 = arith.constant 0 : i32
    return %c0_i32, %c0_i32_0 : i32, i32
  }
  func.func @transform_3(%arg0: i32) -> (i32, i32) {
    %c0_i32 = arith.constant 0 : i32
    %c0_i32_0 = arith.constant 0 : i32
    %c0_i32_1 = arith.constant 0 : i32
    return %c0_i32, %c0_i32_0 : i32, i32
  }
  func.func @transform_4(%arg0: i32) -> (i32, i32) {
    %c0_i32 = arith.constant 0 : i32
    %c0_i32_0 = arith.constant 0 : i32
    %c0_i32_1 = arith.constant 0 : i32
    return %c0_i32, %c0_i32_0 : i32, i32
  }
  func.func @transform_5(%arg0: i32) -> (i32, i32, i32) {
    %c0_i32 = arith.constant 0 : i32
    %c0_i32_0 = arith.constant 0 : i32
    %c0_i32_1 = arith.constant 0 : i32
    %c0_i32_2 = arith.constant 0 : i32
    return %c0_i32, %c0_i32_0, %c0_i32_1 : i32, i32, i32
  }
  func.func @transform_6(%arg0: i32) -> (i32, i32) {
    %c0_i32 = arith.constant 0 : i32
    %c0_i32_0 = arith.constant 0 : i32
    return %c0_i32, %arg0 : i32, i32
  }
}

</mosaic_0001>

<llo_original>
// kernel: tpu_custom_call.1
$region0: #{tpu_custom_call.1}
  #allocation0 [shape = 'u32[]', space=smem, size = 0x4, offset = 0x4, fixed_abs, tag = 'smem constant byte address 0x4 - core index']
  #allocation1 [shape = 'u32[72,128]{1,0:T(1,128)}', space=vmem, size = 0x9000, scoped, tag = 'internal scratch']
  #allocation2 [shape = 'f32[12,128]{1,0:T(8,128)}', space=vmem, size = 0x2000, scoped, tag = 'scratch operand']
  #allocation3 [shape = 'f32[24,128]{1,0:T(8,128)}', space=vmem, size = 0x3000, scoped, tag = 'scratch operand']
  %s0 = inlined_call_operand.vmem [shape: f32[4,256], index: 0, kind: input, shape index: {}]
  %s1 = inlined_call_operand.vmem [shape: f32[16,12], index: 1, kind: input, shape index: {}]
  %s2 = inlined_call_operand.vmem [shape: f32[8,24], index: 2, kind: input, shape index: {}]
  %s3 = inlined_call_operand.vmem [shape: f32[8,8], index: 3, kind: input, shape index: {}]
  %s4 = inlined_call_operand.vmem [shape: f32[2,128], index: 4, kind: input, shape index: {}]
  %s5 = inlined_call_operand.vmem [shape: f32[6,8,1], index: 5, kind: input, shape index: {}]
  %s6 = inlined_call_operand.hbm [shape: f32[8,256], index: 6, kind: output, shape index: {}]
  %s7 = sld [smem:[#allocation0]]
  $region57: #{tpu_custom_call.1} parent=0
    _
  %s9 = ssub.s32 1, %s7
  %s10 = scalar_select 0, %s9, %s7
  $region1: #{tpu_custom_call.1} parent=0
    #allocation4 [shape = 'u8[8192]{0}', space=vmem, size = 0x2000, scoped, tag = 'output window, operand 0']
    #allocation5 [shape = 's32[2]{0}', space=sflag, size = 0x8, scoped, tag = 'scoped memory for tpu_custom_call.1']
    %11 = vsyncpa [#allocation5], 0
    %s12 = scalar_lea.sflag [#allocation5], 1
    %13 = vsyncpa %s12, 0
    loop: start=0, step=1, limit=4
    $region2: #{tpu_custom_call.1} parent=1 // loop_pre_header
      _
    $region3: #{tpu_custom_call.1} parent=1 // loop_header
      %s15 = sphi 0, %s19
      %p16 = scmp.ge.s32.totalorder %s15, 4
      %s25 = sphi 0, %s27
      %s28 = sphi 0, %s25
      %s29 = sphi 0, %s28
      %s45 = sphi 0, %s29
      %s49 = sphi 0, %s49
      %s51 = sphi 0, %s49
      %s52 = sphi 0, %s51
      %s66 = sphi 0, %s52
      %s70 = sphi 0, %s70
      %s72 = sphi 0, %s70
      %s73 = sphi 0, %s72
      %s87 = sphi 0, %s73
      %s91 = sphi 0, %s91
      %s93 = sphi 0, %s91
      %s94 = sphi 0, %s93
      %s108 = sphi 0, %s94
      %s112 = sphi 0, %s112
      %s114 = sphi 0, %s112
      %s115 = sphi 0, %s114
      %s129 = sphi 0, %s115
      %s133 = sphi 0, %s133
      %s135 = sphi 0, %s133
      %s136 = sphi 0, %s135
      %s150 = sphi 0, %s136
      %s156 = sphi 0, %s158
      %s159 = sphi 0, %s156
      %s160 = sphi 0, %s159
      %s176 = sphi 0, %s160
    $region4: #{tpu_custom_call.1} parent=1 // loop_header_branch
      %18 = sbr.rel (%p16) target = $region8
    $region5: #{tpu_custom_call.1} parent=1 // loop_body
      %s20 = ssub.s32 %s15, 1
      %s21 = ssub.s32 %s15, 2
      %s22 = sadd.s32 %s15, 1
      %s23 = ssub.s32 %s15, %s22
      %p24 = scmp.eq.s32.totalorder %s23, 0
      %s26 = sadd.s32 %s25, 1
      %s27 = scalar_select %p24, %s25, %s26
      %p30 = pneg %p24
      %p31 = scmp.eq.s32.totalorder %s15, 1
      %p32 = por %p30, %p31
      %p33 = scmp.ne.s32.totalorder %s25, %s28
      %p34 = scmp.eq.s32.totalorder %s15, 0
      %p35 = por %p33, %p34
      %p36 = scmp.ne.s32.totalorder %s25, %s28
      %p37 = scmp.eq.s32.totalorder %s20, 1
      %p38 = por %p36, %p37
      %p39 = scmp.ne.s32.totalorder %s28, %s29
      %p40 = scmp.eq.s32.totalorder %s20, 0
      %p41 = por %p39, %p40
      %p42 = scmp.ne.s32.totalorder %s28, %s29
      %p43 = scmp.eq.s32.totalorder %s21, 1
      %p44 = por %p42, %p43
      %p46 = scmp.ne.s32.totalorder %s29, %s45
      %p47 = scmp.eq.s32.totalorder %s21, 0
      %p48 = por %p46, %p47
      %s50 = sadd.s32 %s49, 1
      %p53 = scmp.eq.s32.totalorder %s15, 1
      %p54 = scmp.ne.s32.totalorder %s49, %s51
      %p55 = scmp.eq.s32.totalorder %s15, 0
      %p56 = por %p54, %p55
      %p57 = scmp.ne.s32.totalorder %s49, %s51
      %p58 = scmp.eq.s32.totalorder %s20, 1
      %p59 = por %p57, %p58
      %p60 = scmp.ne.s32.totalorder %s51, %s52
      %p61 = scmp.eq.s32.totalorder %s20, 0
      %p62 = por %p60, %p61
      %p63 = scmp.ne.s32.totalorder %s51, %s52
      %p64 = scmp.eq.s32.totalorder %s21, 1
      %p65 = por %p63, %p64
      %p67 = scmp.ne.s32.totalorder %s52, %s66
      %p68 = scmp.eq.s32.totalorder %s21, 0
      %p69 = por %p67, %p68
      %s71 = sadd.s32 %s70, 1
      %p74 = scmp.eq.s32.totalorder %s15, 1
      %p75 = scmp.ne.s32.totalorder %s70, %s72
      %p76 = scmp.eq.s32.totalorder %s15, 0
      %p77 = por %p75, %p76
      %p78 = scmp.ne.s32.totalorder %s70, %s72
      %p79 = scmp.eq.s32.totalorder %s20, 1
      %p80 = por %p78, %p79
      %p81 = scmp.ne.s32.totalorder %s72, %s73
      %p82 = scmp.eq.s32.totalorder %s20, 0
      %p83 = por %p81, %p82
      %p84 = scmp.ne.s32.totalorder %s72, %s73
      %p85 = scmp.eq.s32.totalorder %s21, 1
      %p86 = por %p84, %p85
      %p88 = scmp.ne.s32.totalorder %s73, %s87
      %p89 = scmp.eq.s32.totalorder %s21, 0
      %p90 = por %p88, %p89
      %s92 = sadd.s32 %s91, 1
      %p95 = scmp.eq.s32.totalorder %s15, 1
      %p96 = scmp.ne.s32.totalorder %s91, %s93
      %p97 = scmp.eq.s32.totalorder %s15, 0
      %p98 = por %p96, %p97
      %p99 = scmp.ne.s32.totalorder %s91, %s93
      %p100 = scmp.eq.s32.totalorder %s20, 1
      %p101 = por %p99, %p100
      %p102 = scmp.ne.s32.totalorder %s93, %s94
      %p103 = scmp.eq.s32.totalorder %s20, 0
      %p104 = por %p102, %p103
      %p105 = scmp.ne.s32.totalorder %s93, %s94
      %p106 = scmp.eq.s32.totalorder %s21, 1
      %p107 = por %p105, %p106
      %p109 = scmp.ne.s32.totalorder %s94, %s108
      %p110 = scmp.eq.s32.totalorder %s21, 0
      %p111 = por %p109, %p110
      %s113 = sadd.s32 %s112, 1
      %p116 = scmp.eq.s32.totalorder %s15, 1
      %p117 = scmp.ne.s32.totalorder %s112, %s114
      %p118 = scmp.eq.s32.totalorder %s15, 0
      %p119 = por %p117, %p118
      %p120 = scmp.ne.s32.totalorder %s112, %s114
      %p121 = scmp.eq.s32.totalorder %s20, 1
      %p122 = por %p120, %p121
      %p123 = scmp.ne.s32.totalorder %s114, %s115
      %p124 = scmp.eq.s32.totalorder %s20, 0
      %p125 = por %p123, %p124
      %p126 = scmp.ne.s32.totalorder %s114, %s115
      %p127 = scmp.eq.s32.totalorder %s21, 1
      %p128 = por %p126, %p127
      %p130 = scmp.ne.s32.totalorder %s115, %s129
      %p131 = scmp.eq.s32.totalorder %s21, 0
      %p132 = por %p130, %p131
      %s134 = sadd.s32 %s133, 1
      %p137 = scmp.eq.s32.totalorder %s15, 1
      %p138 = scmp.ne.s32.totalorder %s133, %s135
      %p139 = scmp.eq.s32.totalorder %s15, 0
      %p140 = por %p138, %p139
      %p141 = scmp.ne.s32.totalorder %s133, %s135
      %p142 = scmp.eq.s32.totalorder %s20, 1
      %p143 = por %p141, %p142
      %p144 = scmp.ne.s32.totalorder %s135, %s136
      %p145 = scmp.eq.s32.totalorder %s20, 0
      %p146 = por %p144, %p145
      %p147 = scmp.ne.s32.totalorder %s135, %s136
      %p148 = scmp.eq.s32.totalorder %s21, 1
      %p149 = por %p147, %p148
      %p151 = scmp.ne.s32.totalorder %s136, %s150
      %p152 = scmp.eq.s32.totalorder %s21, 0
      %p153 = por %p151, %p152
      %s154 = ssub.s32 %s15, %s22
      %p155 = scmp.eq.s32.totalorder %s154, 0
      %s157 = sadd.s32 %s156, 1
      %s158 = scalar_select %p155, %s156, %s157
      %p161 = pneg %p155
      %p162 = scmp.eq.s32.totalorder %s15, 1
      %p163 = por %p161, %p162
      %p164 = scmp.ne.s32.totalorder %s156, %s159
      %p165 = scmp.eq.s32.totalorder %s15, 0
      %p166 = por %p164, %p165
      %p167 = scmp.ne.s32.totalorder %s156, %s159
      %p168 = scmp.eq.s32.totalorder %s20, 1
      %p169 = por %p167, %p168
      %p170 = scmp.ne.s32.totalorder %s159, %s160
      %p171 = scmp.eq.s32.totalorder %s20, 0
      %p172 = por %p170, %p171
      %p173 = scmp.ne.s32.totalorder %s159, %s160
      %p174 = scmp.eq.s32.totalorder %s21, 1
      %p175 = por %p173, %p174
      %p177 = scmp.ne.s32.totalorder %s160, %s176
      %p178 = scmp.eq.s32.totalorder %s21, 0
      %p179 = por %p177, %p178
      %p180 = scmp.le.s32.totalorder 1, %s15
      %p181 = scmp.lt.s32.totalorder %s15, 3
      %p182 = pnand %p180, %p181
      %p183 = pneg %p182
      // Predicated region
      $region9: #{tpu_custom_call.1} parent=5 // pred_check
        _
      $region10: #{tpu_custom_call.1} parent=5 // pred_check_branch
        %185 = sbr.rel (%p182) target = $region12
      $region11: #{tpu_custom_call.1} parent=5 // pred_region
        %s186 = ssub.s32 %s15, 1
        // Predicated region
        $region13: #{tpu_custom_call.1} parent=11 // pred_check
          %p187 = pneg %p62
        $region14: #{tpu_custom_call.1} parent=11 // pred_check_branch
          %189 = sbr.rel (%p187) target = $region16
        $region15: #{tpu_custom_call.1} parent=11 // pred_region
          _
        $region16: #{tpu_custom_call.1} parent=11 // pred_fallthru
          _
        // Predicated region
        $region17: #{tpu_custom_call.1} parent=11 // pred_check
          %p190 = pneg %p83
        $region18: #{tpu_custom_call.1} parent=11 // pred_check_branch
          %192 = sbr.rel (%p190) target = $region20
        $region19: #{tpu_custom_call.1} parent=11 // pred_region
          _
        $region20: #{tpu_custom_call.1} parent=11 // pred_fallthru
          _
        // Predicated region
        $region21: #{tpu_custom_call.1} parent=11 // pred_check
          %p193 = pneg %p104
        $region22: #{tpu_custom_call.1} parent=11 // pred_check_branch
          %195 = sbr.rel (%p193) target = $region24
        $region23: #{tpu_custom_call.1} parent=11 // pred_region
          _
        $region24: #{tpu_custom_call.1} parent=11 // pred_fallthru
          _
        // Predicated region
        $region25: #{tpu_custom_call.1} parent=11 // pred_check
          %p196 = pneg %p125
        $region26: #{tpu_custom_call.1} parent=11 // pred_check_branch
          %198 = sbr.rel (%p196) target = $region28
        $region27: #{tpu_custom_call.1} parent=11 // pred_region
          _
        $region28: #{tpu_custom_call.1} parent=11 // pred_fallthru
          _
        // Predicated region
        $region29: #{tpu_custom_call.1} parent=11 // pred_check
          %p199 = pneg %p146
        $region30: #{tpu_custom_call.1} parent=11 // pred_check_branch
          %201 = sbr.rel (%p199) target = $region32
        $region31: #{tpu_custom_call.1} parent=11 // pred_region
          _
        $region32: #{tpu_custom_call.1} parent=11 // pred_fallthru
          _
      $region12: #{tpu_custom_call.1} parent=5 // pred_fallthru
        _
      %p202 = scmp.lt.s32.totalorder %s15, 2
      // Predicated region
      $region33: #{tpu_custom_call.1} parent=5 // pred_check
        %p203 = pneg %p202
      $region34: #{tpu_custom_call.1} parent=5 // pred_check_branch
        %205 = sbr.rel (%p203) target = $region36
      $region35: #{tpu_custom_call.1} parent=5 // pred_region
        // Predicated region
        $region37: #{tpu_custom_call.1} parent=35 // pred_check
          %p206 = pneg %p35
        $region38: #{tpu_custom_call.1} parent=35 // pred_check_branch
          %208 = sbr.rel (%p206) target = $region40
        $region39: #{tpu_custom_call.1} parent=35 // pred_region
          %p209 = scmp.lt.s32.totalorder %s15, 1
          %s210 = scalar_select %p209, %s15, 1
          %s211 = smul.addr %s210, 4
          %s212 = scalar_lea.vmem %s0, %s211
        $region40: #{tpu_custom_call.1} parent=35 // pred_fallthru
          _
      $region36: #{tpu_custom_call.1} parent=5 // pred_fallthru
        _
      %p213 = scmp.le.s32.totalorder 1, %s15
      %p214 = scmp.lt.s32.totalorder %s15, 3
      %p215 = pnand %p213, %p214
      %p216 = pneg %p215
      // Predicated region
      $region41: #{tpu_custom_call.1} parent=5 // pred_check
        _
      $region42: #{tpu_custom_call.1} parent=5 // pred_check_branch
        %218 = sbr.rel (%p215) target = $region44
      $region43: #{tpu_custom_call.1} parent=5 // pred_region
        %s219 = ssub.s32 %s15, 1
        %p220 = scmp.lt.s32.totalorder %s20, 1
        %s221 = scalar_select %p220, %s20, 1
        %s222 = smul.addr %s221, 4
        %s223 = scalar_lea.vmem %s0, %s222
        %p224 = pneg %p41
        %p225 = pneg %p38
        %p226 = pneg %p62
        %p227 = pneg %p59
        %p228 = pneg %p83
        %p229 = pneg %p80
        %p230 = pneg %p104
        %p231 = pneg %p101
        %p232 = pneg %p125
        %p233 = pneg %p122
        %p234 = pneg %p146
        %p235 = pneg %p143
        %p236 = pneg %p172
        %p237 = pneg %p169
        %s238 = sand.u32 %s159, 1
        %s239 = scalar_lea.sflag [#allocation5], %s238
        %s240 = sand.u32 %s159, 1
        %s241 = smul.addr %s240, 8
        %s242 = scalar_lea.vmem [#allocation4], %s241
        %p243 = scmp.lt.s32.totalorder %s20, 1
        %s244 = scalar_select %p243, %s20, 1
        %s245 = smul.addr %s244, 4
        %s246 = scalar_lea.vmem %s0, %s245
        %v247 = vld [vmem:[%s246] sm:$0xf]
        %v248 = vld [vmem:[%s4] sm:$0x3]
        %v249 = vld [vmem:[%s3] sm:$0xff]
        %251 = vrot.lane.b32.xlu0 %v247, 1
        %v252 = vpop.permute.xlu0 %251
        %vm254 = vcmask 1043464
        %255 = vst.msk [vmem:[#allocation2] sm:$0xf] %vm254, %v252
        %vm256 = vcmask 3072
        %257 = vst.msk [vmem:[#allocation2] sm:$0xf] %vm256, 0.0
        %258 = vst [vmem:[#allocation2 + $0x4] sm:$0xf] %v247
        %259 = vrot.lane.b32.xlu0 %v247, 127
        %v260 = vpop.permute.xlu0 %259
        %vm262 = vcmask 1035264
        %263 = vst.msk [vmem:[#allocation2 + $0x8] sm:$0xf] %vm262, %v260
        %vm264 = vcmask 1044472
        %265 = vst.msk [vmem:[#allocation2 + $0x8] sm:$0xf] %vm264, 0.0
        %v266 = vld [vmem:[%s1] sm:$0xff]
        %v267 = vld [vmem:[%s1 + $0x8] sm:$0xff]
        %v268 = vld [vmem:[#allocation2] sm:$0xff]
        %v269 = vld [vmem:[#allocation2 + $0x8] sm:$0xf]
        %vm270 = vcmask 97280
        %v272 = vsel %vm270, %v266, 0
        %v275 = vsel %vm270, %v267, 0
        %vm277 = vcmask 1043456
        %v279 = vsel %vm277, %v269, 0
        %281 = vmatpush.msra.mxu0 0.0
        %282 = vmatpush.msra.mxu0 0.0
        %283 = vmatpush.msra.mxu0 0.0
        %284 = vmatpush.msra.mxu0 0.0
        %285 = vmatpush.msra.mxu0 0.0
        %286 = vmatpush.msra.mxu0 0.0
        %287 = vmatpush.msra.mxu0 0.0
        %288 = vmatpush.msra.mxu0 0.0
        %289 = vmatpush.msra.mxu0 0.0
        %290 = vmatpush.msra.mxu0 0.0
        %291 = vmatpush.msra.mxu0 0.0
        %292 = vmatpush.msra.mxu0 0.0
        %293 = vmatpush.msra.mxu0 0.0
        %294 = vmatpush.msra.mxu0 0.0
        %295 = vmatpush.msra.mxu0 %v279
        %296 = vmatpush.msra.mxu0 %v268
        %297 = vmatmul.f32.gmra.mxu0 %v272
        %v298 = vpop.f32.mrf.mxu0
        %v299 = vadd.f32 0.0, %v298
        %300 = vmatmul.f32.gmra.mxu0 %v275
        %v301 = vpop.f32.mrf.mxu0
        %v302 = vadd.f32 0.0, %v301
        %303 = vdwg.mxu0
        %s304 = scalar_lea.vmem %s5, 32
        %v305 = vld [vmem:[%s304] sm:$0xff]
        %s306 = scalar_lea.vmem %s5, 40
        %v307 = vld [vmem:[%s306] sm:$0xff]
        %308 = vmatpush.xpose.msra.mxu0 0.0
        %309 = vmatpush.xpose.msra.mxu0 0.0
        %310 = vmatpush.xpose.msra.mxu0 0.0
        %311 = vmatpush.xpose.msra.mxu0 0.0
        %312 = vmatpush.xpose.msra.mxu0 0.0
        %313 = vmatpush.xpose.msra.mxu0 0.0
        %314 = vmatpush.xpose.msra.mxu0 0.0
        %315 = vmatpush.xpose.msra.mxu0 0.0
        %316 = vmatpush.xpose.msra.mxu0 0.0
        %317 = vmatpush.xpose.msra.mxu0 0.0
        %318 = vmatpush.xpose.msra.mxu0 0.0
        %319 = vmatpush.xpose.msra.mxu0 0.0
        %320 = vmatpush.xpose.msra.mxu0 0.0
        %321 = vmatpush.xpose.msra.mxu0 0.0
        %322 = vmatpush.xpose.msra.mxu0 0.0
        %323 = vmatpush.xpose.msra.mxu0 %v248
        %324 = vmatmul.f32.gmra.mxu0 %v302
        %v325 = vpop.f32.mrf.mxu0
        %v326 = vadd.f32 0.0, %v325
        %327 = vdwg.mxu0
        %v328 = vmul.f32 %v302, %v302
        %329 = vmatpush.xpose.msra.mxu0 0.0
        %330 = vmatpush.xpose.msra.mxu0 0.0
        %331 = vmatpush.xpose.msra.mxu0 0.0
        %332 = vmatpush.xpose.msra.mxu0 0.0
        %333 = vmatpush.xpose.msra.mxu0 0.0
        %334 = vmatpush.xpose.msra.mxu0 0.0
        %335 = vmatpush.xpose.msra.mxu0 0.0
        %336 = vmatpush.xpose.msra.mxu0 0.0
        %337 = vmatpush.xpose.msra.mxu0 0.0
        %338 = vmatpush.xpose.msra.mxu0 0.0
        %339 = vmatpush.xpose.msra.mxu0 0.0
        %340 = vmatpush.xpose.msra.mxu0 0.0
        %341 = vmatpush.xpose.msra.mxu0 0.0
        %342 = vmatpush.xpose.msra.mxu0 0.0
        %343 = vmatpush.xpose.msra.mxu0 0.0
        %344 = vmatpush.xpose.msra.mxu0 %v248
        %345 = vmatmul.f32.gmra.mxu0 %v328
        %v346 = vpop.f32.mrf.mxu0
        %v347 = vadd.f32 0.0, %v346
        %348 = vdwg.mxu0
        %vm349 = vcmask 64512
        %v351 = vsel %vm349, %v249, 0
        %353 = vmatpush.msra.mxu0 0.0
        %354 = vmatpush.msra.mxu0 0.0
        %355 = vmatpush.msra.mxu0 0.0
        %356 = vmatpush.msra.mxu0 0.0
        %357 = vmatpush.msra.mxu0 0.0
        %358 = vmatpush.msra.mxu0 0.0
        %359 = vmatpush.msra.mxu0 0.0
        %360 = vmatpush.msra.mxu0 0.0
        %361 = vmatpush.msra.mxu0 0.0
        %362 = vmatpush.msra.mxu0 0.0
        %363 = vmatpush.msra.mxu0 0.0
        %364 = vmatpush.msra.mxu0 0.0
        %365 = vmatpush.msra.mxu0 0.0
        %366 = vmatpush.msra.mxu0 0.0
        %367 = vmatpush.msra.mxu0 0.0
        %368 = vmatpush.msra.mxu0 %v326
        %369 = vmatmul.f32.gmra.mxu0 %v351
        %v370 = vpop.f32.mrf.mxu0
        %v371 = vadd.f32 0.0, %v370
        %372 = vdwg.mxu0
        %v373 = vmul.f32 %v371, 0.03125
        %374 = vmatpush.msra.mxu0 0.0
        %375 = vmatpush.msra.mxu0 0.0
        %376 = vmatpush.msra.mxu0 0.0
        %377 = vmatpush.msra.mxu0 0.0
        %378 = vmatpush.msra.mxu0 0.0
        %379 = vmatpush.msra.mxu0 0.0
        %380 = vmatpush.msra.mxu0 0.0
        %381 = vmatpush.msra.mxu0 0.0
        %382 = vmatpush.msra.mxu0 0.0
        %383 = vmatpush.msra.mxu0 0.0
        %384 = vmatpush.msra.mxu0 0.0
        %385 = vmatpush.msra.mxu0 0.0
        %386 = vmatpush.msra.mxu0 0.0
        %387 = vmatpush.msra.mxu0 0.0
        %388 = vmatpush.msra.mxu0 0.0
        %389 = vmatpush.msra.mxu0 %v347
        %390 = vmatmul.f32.gmra.mxu0 %v351
        %v391 = vpop.f32.mrf.mxu0
        %v392 = vadd.f32 0.0, %v391
        %393 = vdwg.mxu0
        %v394 = vmul.f32 %v392, 0.03125
        %v395 = vmul.f32 %v373, %v373
        %v396 = vsub.f32 %v394, %v395
        %v397 = vmax.f32 %v396, 0.0
        %v398 = vadd.f32 %v397, 1e-05
        %v399 = vrsqrt.pop %v398
        %v400 = vmul.f32 %v399, %v398
        %v401 = vmul.f32 %v400, %v399
        %v402 = vmul.f32 0.5, %v401
        %v403 = vsub.f32 1.5, %v402
        %v404 = vmul.f32 %v399, %v403
        %vm405 = vweird.f32 %v398
        %vm406 = vweird.f32 %v399
        %vm407 = vmor %vm405, %vm406
        %v408 = vsel %vm407, %v399, %v404
        %410 = vset.pattern.permute.xlu0 0
        %411 = vperm.xlu0 %410, %v305
        %v412 = vpop.permute.xlu0 %411
        %v414 = vmul.f32 %v412, %v408
        %v415 = vmul.f32 %v373, %v414
        %417 = vset.pattern.permute.xlu0 0
        %418 = vperm.xlu0 %417, %v307
        %v419 = vpop.permute.xlu0 %418
        %v421 = vsub.f32 %v419, %v415
        %vm422 = vcmask 15360
        %v424 = vsel %vm422, %v414, 0
        %v427 = vsel %vm422, %v421, 0
        %vm429 = vcmask 1041408
        %v431 = vsel %vm429, %v248, 0
        %433 = vmatpush.msra.mxu0 0.0
        %434 = vmatpush.msra.mxu0 0.0
        %435 = vmatpush.msra.mxu0 0.0
        %436 = vmatpush.msra.mxu0 0.0
        %437 = vmatpush.msra.mxu0 0.0
        %438 = vmatpush.msra.mxu0 0.0
        %439 = vmatpush.msra.mxu0 0.0
        %440 = vmatpush.msra.mxu0 0.0
        %441 = vmatpush.msra.mxu0 0.0
        %442 = vmatpush.msra.mxu0 0.0
        %443 = vmatpush.msra.mxu0 0.0
        %444 = vmatpush.msra.mxu0 0.0
        %445 = vmatpush.msra.mxu0 0.0
        %446 = vmatpush.msra.mxu0 0.0
        %447 = vmatpush.msra.mxu0 0.0
        %448 = vmatpush.msra.mxu0 %v431
        %449 = vmatmul.f32.gmra.mxu0 %v424
        %v450 = vpop.f32.mrf.mxu0
        %v451 = vadd.f32 0.0, %v450
        %452 = vmatmul.f32.gmra.mxu0 %v427
        %v453 = vpop.f32.mrf.mxu0
        %v454 = vadd.f32 0.0, %v453
        %455 = vdwg.mxu0
        %v456 = vmul.f32 %v302, %v451
        %v457 = vadd.f32 %v456, %v454
        %v458 = vld [vmem:[%s5] sm:$0xff]
        %s459 = scalar_lea.vmem %s5, 8
        %v460 = vld [vmem:[%s459] sm:$0xff]
        %461 = vmatpush.xpose.msra.mxu0 0.0
        %462 = vmatpush.xpose.msra.mxu0 0.0
        %463 = vmatpush.xpose.msra.mxu0 0.0
        %464 = vmatpush.xpose.msra.mxu0 0.0
        %465 = vmatpush.xpose.msra.mxu0 0.0
        %466 = vmatpush.xpose.msra.mxu0 0.0
        %467 = vmatpush.xpose.msra.mxu0 0.0
        %468 = vmatpush.xpose.msra.mxu0 0.0
        %469 = vmatpush.xpose.msra.mxu0 0.0
        %470 = vmatpush.xpose.msra.mxu0 0.0
        %471 = vmatpush.xpose.msra.mxu0 0.0
        %472 = vmatpush.xpose.msra.mxu0 0.0
        %473 = vmatpush.xpose.msra.mxu0 0.0
        %474 = vmatpush.xpose.msra.mxu0 0.0
        %475 = vmatpush.xpose.msra.mxu0 0.0
        %476 = vmatpush.xpose.msra.mxu0 %v248
        %477 = vmatmul.f32.gmra.mxu0 %v299
        %v478 = vpop.f32.mrf.mxu0
        %v479 = vadd.f32 0.0, %v478
        %480 = vdwg.mxu0
        %v481 = vmul.f32 %v299, %v299
        %482 = vmatpush.xpose.msra.mxu0 0.0
        %483 = vmatpush.xpose.msra.mxu0 0.0
        %484 = vmatpush.xpose.msra.mxu0 0.0
        %485 = vmatpush.xpose.msra.mxu0 0.0
        %486 = vmatpush.xpose.msra.mxu0 0.0
        %487 = vmatpush.xpose.msra.mxu0 0.0
        %488 = vmatpush.xpose.msra.mxu0 0.0
        %489 = vmatpush.xpose.msra.mxu0 0.0
        %490 = vmatpush.xpose.msra.mxu0 0.0
        %491 = vmatpush.xpose.msra.mxu0 0.0
        %492 = vmatpush.xpose.msra.mxu0 0.0
        %493 = vmatpush.xpose.msra.mxu0 0.0
        %494 = vmatpush.xpose.msra.mxu0 0.0
        %495 = vmatpush.xpose.msra.mxu0 0.0
        %496 = vmatpush.xpose.msra.mxu0 0.0
        %497 = vmatpush.xpose.msra.mxu0 %v248
        %498 = vmatmul.f32.gmra.mxu0 %v481
        %v499 = vpop.f32.mrf.mxu0
        %v500 = vadd.f32 0.0, %v499
        %501 = vdwg.mxu0
        %502 = vmatpush.msra.mxu0 0.0
        %503 = vmatpush.msra.mxu0 0.0
        %504 = vmatpush.msra.mxu0 0.0
        %505 = vmatpush.msra.mxu0 0.0
        %506 = vmatpush.msra.mxu0 0.0
        %507 = vmatpush.msra.mxu0 0.0
        %508 = vmatpush.msra.mxu0 0.0
        %509 = vmatpush.msra.mxu0 0.0
        %510 = vmatpush.msra.mxu0 0.0
        %511 = vmatpush.msra.mxu0 0.0
        %512 = vmatpush.msra.mxu0 0.0
        %513 = vmatpush.msra.mxu0 0.0
        %514 = vmatpush.msra.mxu0 0.0
        %515 = vmatpush.msra.mxu0 0.0
        %516 = vmatpush.msra.mxu0 0.0
        %517 = vmatpush.msra.mxu0 %v479
        %518 = vmatmul.f32.gmra.mxu0 %v351
        %v519 = vpop.f32.mrf.mxu0
        %v520 = vadd.f32 0.0, %v519
        %521 = vdwg.mxu0
        %v522 = vmul.f32 %v520, 0.03125
        %523 = vmatpush.msra.mxu0 0.0
        %524 = vmatpush.msra.mxu0 0.0
        %525 = vmatpush.msra.mxu0 0.0
        %526 = vmatpush.msra.mxu0 0.0
        %527 = vmatpush.msra.mxu0 0.0
        %528 = vmatpush.msra.mxu0 0.0
        %529 = vmatpush.msra.mxu0 0.0
        %530 = vmatpush.msra.mxu0 0.0
        %531 = vmatpush.msra.mxu0 0.0
        %532 = vmatpush.msra.mxu0 0.0
        %533 = vmatpush.msra.mxu0 0.0
        %534 = vmatpush.msra.mxu0 0.0
        %535 = vmatpush.msra.mxu0 0.0
        %536 = vmatpush.msra.mxu0 0.0
        %537 = vmatpush.msra.mxu0 0.0
        %538 = vmatpush.msra.mxu0 %v500
        %539 = vmatmul.f32.gmra.mxu0 %v351
        %v540 = vpop.f32.mrf.mxu0
        %v541 = vadd.f32 0.0, %v540
        %542 = vdwg.mxu0
        %v543 = vmul.f32 %v541, 0.03125
        %v544 = vmul.f32 %v522, %v522
        %v545 = vsub.f32 %v543, %v544
        %v546 = vmax.f32 %v545, 0.0
        %v547 = vadd.f32 %v546, 1e-05
        %v548 = vrsqrt.pop %v547
        %v549 = vmul.f32 %v548, %v547
        %v550 = vmul.f32 %v549, %v548
        %v551 = vmul.f32 0.5, %v550
        %v552 = vsub.f32 1.5, %v551
        %v553 = vmul.f32 %v548, %v552
        %vm554 = vweird.f32 %v547
        %vm555 = vweird.f32 %v548
        %vm556 = vmor %vm554, %vm555
        %v557 = vsel %vm556, %v548, %v553
        %559 = vset.pattern.permute.xlu0 0
        %560 = vperm.xlu0 %559, %v458
        %v561 = vpop.permute.xlu0 %560
        %v563 = vmul.f32 %v561, %v557
        %v564 = vmul.f32 %v522, %v563
        %566 = vset.pattern.permute.xlu0 0
        %567 = vperm.xlu0 %566, %v460
        %v568 = vpop.permute.xlu0 %567
        %v570 = vsub.f32 %v568, %v564
        %v572 = vsel %vm422, %v563, 0
        %v575 = vsel %vm422, %v570, 0
        %577 = vmatpush.msra.mxu0 0.0
        %578 = vmatpush.msra.mxu0 0.0
        %579 = vmatpush.msra.mxu0 0.0
        %580 = vmatpush.msra.mxu0 0.0
        %581 = vmatpush.msra.mxu0 0.0
        %582 = vmatpush.msra.mxu0 0.0
        %583 = vmatpush.msra.mxu0 0.0
        %584 = vmatpush.msra.mxu0 0.0
        %585 = vmatpush.msra.mxu0 0.0
        %586 = vmatpush.msra.mxu0 0.0
        %587 = vmatpush.msra.mxu0 0.0
        %588 = vmatpush.msra.mxu0 0.0
        %589 = vmatpush.msra.mxu0 0.0
        %590 = vmatpush.msra.mxu0 0.0
        %591 = vmatpush.msra.mxu0 0.0
        %592 = vmatpush.msra.mxu0 %v431
        %593 = vmatmul.f32.gmra.mxu0 %v572
        %v594 = vpop.f32.mrf.mxu0
        %v595 = vadd.f32 0.0, %v594
        %596 = vmatmul.f32.gmra.mxu0 %v575
        %v597 = vpop.f32.mrf.mxu0
        %v598 = vadd.f32 0.0, %v597
        %599 = vdwg.mxu0
        %v600 = vmul.f32 %v299, %v595
        %v601 = vadd.f32 %v600, %v598
        %v602 = vmax.f32 %v601, 0.0
        %604 = vrot.lane.b32.xlu0 %v602, 1
        %v605 = vpop.permute.xlu0 %604
        %vm607 = vcmask 1047560
        %608 = vst.msk [vmem:[#allocation3] sm:$0xff] %vm607, %v605
        %vm609 = vcmask 7168
        %610 = vst.msk [vmem:[#allocation3] sm:$0xff] %vm609, 0.0
        %611 = vst [vmem:[#allocation3 + $0x8] sm:$0xff] %v602
        %612 = vrot.lane.b32.xlu0 %v602, 127
        %v613 = vpop.permute.xlu0 %612
        %vm615 = vcmask 1039360
        %616 = vst.msk [vmem:[#allocation3 + $0x10] sm:$0xff] %vm615, %v613
        %vm617 = vcmask 1048568
        %618 = vst.msk [vmem:[#allocation3 + $0x10] sm:$0xff] %vm617, 0.0
        %v619 = vld [vmem:[%s2] sm:$0xff]
        %v620 = vld [vmem:[#allocation3] sm:$0xff]
        %v621 = vld [vmem:[#allocation3 + $0x8] sm:$0xff]
        %v622 = vld [vmem:[#allocation3 + $0x10] sm:$0xff]
        %vm623 = vcmask 195584
        %v625 = vsel %vm623, %v619, 0
        %627 = vmatpush.msra.mxu0 0.0
        %628 = vmatpush.msra.mxu0 0.0
        %629 = vmatpush.msra.mxu0 0.0
        %630 = vmatpush.msra.mxu0 0.0
        %631 = vmatpush.msra.mxu0 0.0
        %632 = vmatpush.msra.mxu0 0.0
        %633 = vmatpush.msra.mxu0 0.0
        %634 = vmatpush.msra.mxu0 0.0
        %635 = vmatpush.msra.mxu0 0.0
        %636 = vmatpush.msra.mxu0 0.0
        %637 = vmatpush.msra.mxu0 0.0
        %638 = vmatpush.msra.mxu0 0.0
        %639 = vmatpush.msra.mxu0 0.0
        %640 = vmatpush.msra.mxu0 %v622
        %641 = vmatpush.msra.mxu0 %v621
        %642 = vmatpush.msra.mxu0 %v620
        %643 = vmatmul.f32.gmra.mxu0 %v625
        %v644 = vpop.f32.mrf.mxu0
        %v645 = vadd.f32 0.0, %v644
        %646 = vdwg.mxu0
        %s647 = scalar_lea.vmem %s5, 16
        %v648 = vld [vmem:[%s647] sm:$0xff]
        %s649 = scalar_lea.vmem %s5, 24
        %v650 = vld [vmem:[%s649] sm:$0xff]
        %651 = vmatpush.xpose.msra.mxu0 0.0
        %652 = vmatpush.xpose.msra.mxu0 0.0
        %653 = vmatpush.xpose.msra.mxu0 0.0
        %654 = vmatpush.xpose.msra.mxu0 0.0
        %655 = vmatpush.xpose.msra.mxu0 0.0
        %656 = vmatpush.xpose.msra.mxu0 0.0
        %657 = vmatpush.xpose.msra.mxu0 0.0
        %658 = vmatpush.xpose.msra.mxu0 0.0
        %659 = vmatpush.xpose.msra.mxu0 0.0
        %660 = vmatpush.xpose.msra.mxu0 0.0
        %661 = vmatpush.xpose.msra.mxu0 0.0
        %662 = vmatpush.xpose.msra.mxu0 0.0
        %663 = vmatpush.xpose.msra.mxu0 0.0
        %664 = vmatpush.xpose.msra.mxu0 0.0
        %665 = vmatpush.xpose.msra.mxu0 0.0
        %666 = vmatpush.xpose.msra.mxu0 %v248
        %667 = vmatmul.f32.gmra.mxu0 %v645
        %v668 = vpop.f32.mrf.mxu0
        %v669 = vadd.f32 0.0, %v668
        %670 = vdwg.mxu0
        %v671 = vmul.f32 %v645, %v645
        %672 = vmatpush.xpose.msra.mxu0 0.0
        %673 = vmatpush.xpose.msra.mxu0 0.0
        %674 = vmatpush.xpose.msra.mxu0 0.0
        %675 = vmatpush.xpose.msra.mxu0 0.0
        %676 = vmatpush.xpose.msra.mxu0 0.0
        %677 = vmatpush.xpose.msra.mxu0 0.0
        %678 = vmatpush.xpose.msra.mxu0 0.0
        %679 = vmatpush.xpose.msra.mxu0 0.0
        %680 = vmatpush.xpose.msra.mxu0 0.0
        %681 = vmatpush.xpose.msra.mxu0 0.0
        %682 = vmatpush.xpose.msra.mxu0 0.0
        %683 = vmatpush.xpose.msra.mxu0 0.0
        %684 = vmatpush.xpose.msra.mxu0 0.0
        %685 = vmatpush.xpose.msra.mxu0 0.0
        %686 = vmatpush.xpose.msra.mxu0 0.0
        %687 = vmatpush.xpose.msra.mxu0 %v248
        %688 = vmatmul.f32.gmra.mxu0 %v671
        %v689 = vpop.f32.mrf.mxu0
        %v690 = vadd.f32 0.0, %v689
        %691 = vdwg.mxu0
        %692 = vmatpush.msra.mxu0 0.0
        %693 = vmatpush.msra.mxu0 0.0
        %694 = vmatpush.msra.mxu0 0.0
        %695 = vmatpush.msra.mxu0 0.0
        %696 = vmatpush.msra.mxu0 0.0
        %697 = vmatpush.msra.mxu0 0.0
        %698 = vmatpush.msra.mxu0 0.0
        %699 = vmatpush.msra.mxu0 0.0
        %700 = vmatpush.msra.mxu0 0.0
        %701 = vmatpush.msra.mxu0 0.0
        %702 = vmatpush.msra.mxu0 0.0
        %703 = vmatpush.msra.mxu0 0.0
        %704 = vmatpush.msra.mxu0 0.0
        %705 = vmatpush.msra.mxu0 0.0
        %706 = vmatpush.msra.mxu0 0.0
        %707 = vmatpush.msra.mxu0 %v669
        %708 = vmatmul.f32.gmra.mxu0 %v351
        %v709 = vpop.f32.mrf.mxu0
        %v710 = vadd.f32 0.0, %v709
        %711 = vdwg.mxu0
        %v712 = vmul.f32 %v710, 0.03125
        %713 = vmatpush.msra.mxu0 0.0
        %714 = vmatpush.msra.mxu0 0.0
        %715 = vmatpush.msra.mxu0 0.0
        %716 = vmatpush.msra.mxu0 0.0
        %717 = vmatpush.msra.mxu0 0.0
        %718 = vmatpush.msra.mxu0 0.0
        %719 = vmatpush.msra.mxu0 0.0
        %720 = vmatpush.msra.mxu0 0.0
        %721 = vmatpush.msra.mxu0 0.0
        %722 = vmatpush.msra.mxu0 0.0
        %723 = vmatpush.msra.mxu0 0.0
        %724 = vmatpush.msra.mxu0 0.0
        %725 = vmatpush.msra.mxu0 0.0
        %726 = vmatpush.msra.mxu0 0.0
        %727 = vmatpush.msra.mxu0 0.0
        %728 = vmatpush.msra.mxu0 %v690
        %729 = vmatmul.f32.gmra.mxu0 %v351
        %v730 = vpop.f32.mrf.mxu0
        %v731 = vadd.f32 0.0, %v730
        %732 = vdwg.mxu0
        %v733 = vmul.f32 %v731, 0.03125
        %v734 = vmul.f32 %v712, %v712
        %v735 = vsub.f32 %v733, %v734
        %v736 = vmax.f32 %v735, 0.0
        %v737 = vadd.f32 %v736, 1e-05
        %v738 = vrsqrt.pop %v737
        %v739 = vmul.f32 %v738, %v737
        %v740 = vmul.f32 %v739, %v738
        %v741 = vmul.f32 0.5, %v740
        %v742 = vsub.f32 1.5, %v741
        %v743 = vmul.f32 %v738, %v742
        %vm744 = vweird.f32 %v737
        %vm745 = vweird.f32 %v738
        %vm746 = vmor %vm744, %vm745
        %v747 = vsel %vm746, %v738, %v743
        %749 = vset.pattern.permute.xlu0 0
        %750 = vperm.xlu0 %749, %v648
        %v751 = vpop.permute.xlu0 %750
        %v753 = vmul.f32 %v751, %v747
        %v754 = vmul.f32 %v712, %v753
        %756 = vset.pattern.permute.xlu0 0
        %757 = vperm.xlu0 %756, %v650
        %v758 = vpop.permute.xlu0 %757
        %v760 = vsub.f32 %v758, %v754
        %v762 = vsel %vm422, %v753, 0
        %v765 = vsel %vm422, %v760, 0
        %767 = vmatpush.msra.mxu0 0.0
        %768 = vmatpush.msra.mxu0 0.0
        %769 = vmatpush.msra.mxu0 0.0
        %770 = vmatpush.msra.mxu0 0.0
        %771 = vmatpush.msra.mxu0 0.0
        %772 = vmatpush.msra.mxu0 0.0
        %773 = vmatpush.msra.mxu0 0.0
        %774 = vmatpush.msra.mxu0 0.0
        %775 = vmatpush.msra.mxu0 0.0
        %776 = vmatpush.msra.mxu0 0.0
        %777 = vmatpush.msra.mxu0 0.0
        %778 = vmatpush.msra.mxu0 0.0
        %779 = vmatpush.msra.mxu0 0.0
        %780 = vmatpush.msra.mxu0 0.0
        %781 = vmatpush.msra.mxu0 0.0
        %782 = vmatpush.msra.mxu0 %v431
        %783 = vmatmul.f32.gmra.mxu0 %v762
        %v784 = vpop.f32.mrf.mxu0
        %v785 = vadd.f32 0.0, %v784
        %786 = vmatmul.f32.gmra.mxu0 %v765
        %v787 = vpop.f32.mrf.mxu0
        %v788 = vadd.f32 0.0, %v787
        %789 = vdwg.mxu0
        %v790 = vmul.f32 %v645, %v785
        %v791 = vadd.f32 %v790, %v788
        %v792 = vadd.f32 %v791, %v457
        %v793 = vmax.f32 %v792, 0.0
        %794 = vst [vmem:[%s242] sm:$0xff] %v793
        %s795 = sand.u32 %s159, 1
        %s796 = scalar_lea.sflag [#allocation5], %s795
        %s797 = sand.u32 %s159, 1
        %s798 = smul.addr %s797, 8
        %s799 = scalar_lea.vmem [#allocation4], %s798
        // Predicated region
        $region45: #{tpu_custom_call.1} parent=43 // pred_check
          %p800 = pneg %p169
        $region46: #{tpu_custom_call.1} parent=43 // pred_check_branch
          %802 = sbr.rel (%p800) target = $region48
        $region47: #{tpu_custom_call.1} parent=43 // pred_region
          %804 = vsyncadd %s796, 0
          %s805 = smul.addr %s20, 8
          %s806 = scalar_lea.hbm %s6, %s805
          %s808 = sshll.u32 %s799, 4
          %s809 = int_to_ptr.vmem [resolvable:$true] %s808
          %s810 = sshll.u32 %s806, 4
          %s811 = int_to_ptr.hbm [resolvable:$true] %s810
          %813 = dma.vmem_to_hbm [thread:$0]  %s809, 128, %s811, %s796
        $region48: #{tpu_custom_call.1} parent=43 // pred_fallthru
          _
      $region44: #{tpu_custom_call.1} parent=5 // pred_fallthru
        _
      %p814 = scmp.le.s32.totalorder 2, %s15
      // Predicated region
      $region49: #{tpu_custom_call.1} parent=5 // pred_check
        %p815 = pneg %p814
      $region50: #{tpu_custom_call.1} parent=5 // pred_check_branch
        %817 = sbr.rel (%p815) target = $region52
      $region51: #{tpu_custom_call.1} parent=5 // pred_region
        %s818 = ssub.s32 %s15, 2
        // Predicated region
        $region53: #{tpu_custom_call.1} parent=51 // pred_check
          %p819 = pneg %p175
        $region54: #{tpu_custom_call.1} parent=51 // pred_check_branch
          %821 = sbr.rel (%p819) target = $region56
        $region55: #{tpu_custom_call.1} parent=51 // pred_region
          %s822 = sand.u32 %s160, 1
          %s823 = scalar_lea.sflag [#allocation5], %s822
          %s824 = sand.u32 %s160, 1
          %s825 = smul.addr %s824, 8
          %s826 = scalar_lea.vmem [#allocation4], %s825
          %828 = dma.done %s823, 128
        $region56: #{tpu_custom_call.1} parent=51 // pred_fallthru
          _
      $region52: #{tpu_custom_call.1} parent=5 // pred_fallthru
        _
    $region6: #{tpu_custom_call.1} parent=1 // loop_footer
      %s19 = sadd.s32 1, %s15
    $region7: #{tpu_custom_call.1} parent=1 // loop_footer_branch
      %14 = sbr.rel target = $region3
    $region8: #{tpu_custom_call.1} parent=1 // loop_exit
      _
    %829 = vsyncpa [#allocation5], 1
    %s830 = scalar_lea.sflag [#allocation5], 1
    %831 = vsyncpa %s830, 1

</llo_original>
